<compile_context>
chip_gen: v6e
topology: v6e:2x2x1
jax: 0.10.0
libtpu: 0.0.40
codegen_flags: <defaults>
</compile_context>

<pallas_src>
import numpy as np
import jax
import jax.numpy as jnp
from jax.experimental import pallas as pl
from jax.experimental.pallas import tpu as pltpu


def _round_up(n, m):
    return ((n + m - 1) // m) * m


def _make_band_matrices(w, f, tin, kpad):
    """Per-height-tap banded RHS matrices for the transposed conv.

    Row p of the LHS holds input column (tile_start + p - 1):
      p = 0        -> left halo column  (tile_start - 1)
      p = 1..tin   -> tile columns
      p = tin + 1  -> right halo column (tile_start + tin)
    Output column q (local) is ow = tile_start*f + q, with it = q // f, r = q % f:
      centre   (input col it)   : w[kh, r + f//2]
      left     (it-1, r <  f//2): w[kh, f + r + f//2]
      right    (it+1, r >= f//2): w[kh, r + f//2 - f]
    """
    pad = f // 2
    half = f // 2
    ott = tin * f
    band = np.zeros((3, kpad, ott), np.float32)
    for q in range(ott):
        it, r = divmod(q, f)
        for kh in range(3):
            band[kh, it + 1, q] += w[kh, r + pad]              # centre
            if r < half:
                band[kh, it, q] += w[kh, f + r + pad]          # left neighbour
            else:
                band[kh, it + 2, q] += w[kh, r + pad - f]      # right neighbour
    return band


def _make_kernel(bias, tin, kpad, t_valid):
    """Kernel factory; tile geometry and bias are trace-time constants."""
    needs_mask = (t_valid % tin) != 0

    def kernel(x_ref, halo_ref, w_ref, o_ref):
        # x_ref   : (1, M, tin)       centre input columns of this tile (f32)
        # halo_ref: (1, 1, M, 2)      input columns j*tin-1 and (j+1)*tin (0 at edges)
        # w_ref   : (3, kpad, tin*f)  constant banded conv matrices (bf16)
        # o_ref   : (1, M, tin*f)     interleaved output tile
        xc = x_ref[0]
        m = xc.shape[0]
        if needs_mask:
            # Zero the garbage tail of the partial last input block.
            j = pl.program_id(1)
            col = jax.lax.broadcasted_iota(jnp.int32, (1, tin), 1) + j * tin
            xc = jnp.where(col < t_valid, xc, 0.0)

        halo = halo_ref[0, 0]                                   # (M, 2)
        parts = [halo[:, 0:1], xc, halo[:, 1:2]]
        if kpad > tin + 2:
            parts.append(jnp.zeros((m, kpad - tin - 2), jnp.float32))
        xe = jnp.concatenate(parts, axis=1)                     # (M, kpad), kh = 1
        zrow = jnp.zeros((1, kpad), jnp.float32)
        x_up = jnp.concatenate([xe[1:, :], zrow], axis=0)       # kh = 0: row oh reads oh+1
        x_dn = jnp.concatenate([zrow, xe[:-1, :]], axis=0)      # kh = 2: row oh reads oh-1

        acc = jnp.dot(x_up.astype(jnp.bfloat16), w_ref[0],
                      preferred_element_type=jnp.float32)
        acc = acc + jnp.dot(xe.astype(jnp.bfloat16), w_ref[1],
                            preferred_element_type=jnp.float32)
        acc = acc + jnp.dot(x_dn.astype(jnp.bfloat16), w_ref[2],
                            preferred_element_type=jnp.float32)
        acc = acc + bias
        o_ref[0] = jnp.maximum(acc, 0.4 * acc)                  # fused leaky_relu(0.4)

    return kernel


def convt_leaky(x, w, bias, f):
    """x: (B, M, T) f32, w: (3, 2f), bias: scalar -> (B, M, T*f) f32 (interleaved)."""
    B, M, T = x.shape
    f = int(f)
    assert f % 2 == 0, "even upsample factors only (DiffWave uses [16, 16])"
    x = x.astype(jnp.float32)

    # Input-time tile: multiple of 128 lanes targeting >= 512 output lanes per step,
    # or the whole (small) time axis in a single block.
    tin = 128 * max(1, -(-512 // (128 * f)))
    if T <= tin:
        tin = T
    ott = tin * f
    nT = pl.cdiv(T, tin)
    kpad = _round_up(tin + 2, 8)

    # Tiny per-tile halo columns (input cols j*tin-1 and (j+1)*tin, zero at edges).
    idx = np.arange(nT)
    l_idx = idx * tin - 1
    r_idx = (idx + 1) * tin
    hl = jnp.take(x, jnp.asarray(np.clip(l_idx, 0, T - 1)), axis=2)   # (B, M, nT)
    hr = jnp.take(x, jnp.asarray(np.clip(r_idx, 0, T - 1)), axis=2)
    hl = hl * jnp.asarray((l_idx >= 0).astype(np.float32))
    hr = hr * jnp.asarray((r_idx < T).astype(np.float32))
    halos = jnp.transpose(jnp.stack([hl, hr], axis=-1), (0, 2, 1, 3))  # (B, nT, M, 2)

    band = jnp.asarray(
        _make_band_matrices(np.asarray(w, np.float32), f, tin, kpad),
        dtype=jnp.bfloat16)                                            # (3, kpad, ott)

    kernel = _make_kernel(float(bias), tin, kpad, T)
    out = pl.pallas_call(
        kernel,
        out_shape=jax.ShapeDtypeStruct((B, M, T * f), jnp.float32),
        grid=(B, nT),
        in_specs=[
            pl.BlockSpec((1, M, tin), lambda b, j: (b, 0, j)),
            pl.BlockSpec((1, 1, M, 2), lambda b, j: (b, j, 0, 0)),
            pl.BlockSpec((3, kpad, ott), lambda b, j: (0, 0, 0)),
        ],
        out_specs=pl.BlockSpec((1, M, ott), lambda b, j: (b, 0, j)),
        compiler_params=pltpu.CompilerParams(
            dimension_semantics=("parallel", "parallel"),
            vmem_limit_bytes=48 * 1024 * 1024,
        ),
    )(x, halos, band)
    return out


class SpectrogramUpsamplerPallas:
    """Pallas equivalent of the PyTorch SpectrogramUpsampler module."""

    def __init__(self, upsample_factors, key):
        self.factors = tuple(int(v) for v in upsample_factors)
        keys = jax.random.split(key, 2 * len(self.factors))
        self.params = []
        for i, f in enumerate(self.factors):
            assert f % 2 == 0
            kH, kW = 3, 2 * f
            bound = 1.0 / np.sqrt(kH * kW)            # deterministic synthetic init
            w = jax.random.uniform(keys[2 * i], (kH, kW), jnp.float32, -bound, bound)
            b = jax.random.uniform(keys[2 * i + 1], (), jnp.float32, -bound, bound)
            # Snap params to bf16-representable values: the kernel feeds the MXU with
            # bf16 operands, so bf16-exact params keep the f32 math effectively exact.
            w = w.astype(jnp.bfloat16).astype(jnp.float32)
            b = b.astype(jnp.bfloat16).astype(jnp.float32)
            self.params.append((w, b))

    def __call__(self, x):
        # x: (B, M, T) float32 (torch unsqueeze/squeeze of the channel dim is implicit)
        for (w, b), f in zip(self.params, self.factors):
            x = convt_leaky(x, w, b, f)               # conv_transpose + leaky_relu fused
        return x


# ------------------------- pure NumPy reference -------------------------------
def _ref_conv_transpose_1ch(x, w, b, f):
    B, M, T = x.shape
    kH, kW = w.shape
    pad_h, pad_w = 1, f // 2
    OH = (M - 1) - 2 * pad_h + kH
    OW = (T - 1) * f - 2 * pad_w + kW
    y = np.full((B, OH, OW), float(b), np.float64)
    for n in range(B):
        for ih in range(M):
            for iw in range(T):
                v = float(x[n, ih, iw])
                for kh in range(kH):
                    oh = ih + kh - pad_h
                    if not (0 <= oh < OH):
                        continue
                    for kw in range(kW):
                        ow = iw * f + kw - pad_w
                        if 0 <= ow < OW:
                            y[n, oh, ow] += v * float(w[kh, kw])
    return y


def _ref_forward(x, params, factors):
    x = np.asarray(x, np.float64)
    for (w, b), f in zip(params, factors):
        x = _ref_conv_transpose_1ch(x, np.asarray(w), np.asarray(b), f)
        x = np.where(x >= 0, x, 0.4 * x)
    return x


if __name__ == "__main__":
    key = jax.random.PRNGKey(0)
    k_x, k_p = jax.random.split(key)

    upsample_factors = (4, 4)          # small factors for the demo (DiffWave: (16, 16))
    B, M, T = 2, 8, 80                 # layer 2 exercises multi-tile + halo + masking
    x = jax.random.normal(k_x, (B, M, T), jnp.float32)
    # bf16-representable test input: layer-1's bf16-operand MXU matmuls are then exact;
    # layer-2 rounds its f32 intermediate once (covered by the tolerance below).
    x = x.astype(jnp.bfloat16).astype(jnp.float32)

    model = SpectrogramUpsamplerPallas(upsample_factors, k_p)
    y = jax.block_until_ready(model(x))

    assert y.shape == (B, M, T * upsample_factors[0] * upsample_factors[1]), y.shape
    y_ref = _ref_forward(np.asarray(x), model.params, upsample_factors)
    np.testing.assert_allclose(np.asarray(y), y_ref, rtol=5e-3, atol=5e-3)
    print("KERNEL_OK")
</pallas_src>

<mosaic_0001>
module attributes {stable_mosaic.version = 11 : i64} {
  func.func @kernel(%arg0: i32, %arg1: i32, %arg2: memref<1x8x80xf32, #tpu.memory_space<vmem>>, %arg3: memref<1x1x8x2xf32, #tpu.memory_space<vmem>>, %arg4: memref<3x88x320xbf16, #tpu.memory_space<vmem>>, %arg5: memref<1x8x320xf32, #tpu.memory_space<vmem>>) attributes {dimension_semantics = [#tpu.dimension_semantics<parallel>, #tpu.dimension_semantics<parallel>], iteration_bounds = array<i64: 2, 1>, scalar_prefetch = 0 : i64, scratch_operands = 0 : i64, tpu.core_type = #tpu.core_type<tc>, window_params = [{transform_indices = @transform_0, window_bounds = array<i64: 1, 8, 80>}, {transform_indices = @transform_1, window_bounds = array<i64: 1, 1, 8, 2>}, {pipeline_mode = #tpu.pipeline_mode<synchronous>, transform_indices = @transform_2, window_bounds = array<i64: 3, 88, 320>}, {transform_indices = @transform_3, window_bounds = array<i64: 1, 8, 320>}]} {
    %c0 = arith.constant 0 : index
    %c0_0 = arith.constant 0 : index
    %c0_1 = arith.constant 0 : index
    %0 = vector.load %arg2[%c0, %c0_0, %c0_1] : memref<1x8x80xf32, #tpu.memory_space<vmem>>, vector<1x8x80xf32>
    %1 = vector.shape_cast %0 : vector<1x8x80xf32> to vector<8x80xf32>
    %c0_2 = arith.constant 0 : index
    %c0_3 = arith.constant 0 : index
    %c0_4 = arith.constant 0 : index
    %c0_5 = arith.constant 0 : index
    %2 = vector.load %arg3[%c0_2, %c0_3, %c0_4, %c0_5] : memref<1x1x8x2xf32, #tpu.memory_space<vmem>>, vector<1x1x8x2xf32>
    %3 = vector.shape_cast %2 : vector<1x1x8x2xf32> to vector<8x2xf32>
    %4 = vector.extract_strided_slice %3 {offsets = [0, 0], sizes = [8, 1], strides = [1, 1]} : vector<8x2xf32> to vector<8x1xf32>
    %5 = vector.extract_strided_slice %3 {offsets = [0, 1], sizes = [8, 1], strides = [1, 1]} : vector<8x2xf32> to vector<8x1xf32>
    %cst = arith.constant 0.000000e+00 : f32
    %6 = vector.broadcast %cst : f32 to vector<8x6xf32>
    %7 = tpu.concatenate %4, %1, %5, %6 in 1 : vector<8x1xf32>, vector<8x80xf32>, vector<8x1xf32>, vector<8x6xf32> -> vector<8x88xf32>
    %cst_6 = arith.constant 0.000000e+00 : f32
    %8 = vector.broadcast %cst_6 : f32 to vector<1x88xf32>
    %9 = vector.extract_strided_slice %7 {offsets = [1, 0], sizes = [7, 88], strides = [1, 1]} : vector<8x88xf32> to vector<7x88xf32>
    %10 = tpu.concatenate %9, %8 in 0 : vector<7x88xf32>, vector<1x88xf32> -> vector<8x88xf32>
    %11 = vector.extract_strided_slice %7 {offsets = [0, 0], sizes = [7, 88], strides = [1, 1]} : vector<8x88xf32> to vector<7x88xf32>
    %12 = tpu.concatenate %8, %11 in 0 : vector<1x88xf32>, vector<7x88xf32> -> vector<8x88xf32>
    %13 = arith.truncf %10 : vector<8x88xf32> to vector<8x88xbf16>
    %c0_7 = arith.constant 0 : index
    %c0_8 = arith.constant 0 : index
    %c0_9 = arith.constant 0 : index
    %14 = vector.load %arg4[%c0_7, %c0_8, %c0_9] : memref<3x88x320xbf16, #tpu.memory_space<vmem>>, vector<1x88x320xbf16>
    %15 = vector.shape_cast %14 : vector<1x88x320xbf16> to vector<88x320xbf16>
    %cst_10 = arith.constant dense<0.000000e+00> : vector<8x320xf32>
    %16 = tpu.matmul %13, %15, %cst_10 {dimension_numbers = #tpu.dot_dimension_numbers<[1], [0], [0], [1], [0, 0, 1, 1], [], []>} : vector<8x88xbf16>, vector<88x320xbf16>, vector<8x320xf32> -> vector<8x320xf32>
    %17 = arith.truncf %7 : vector<8x88xf32> to vector<8x88xbf16>
    %c1 = arith.constant 1 : index
    %c0_11 = arith.constant 0 : index
    %c0_12 = arith.constant 0 : index
    %18 = vector.load %arg4[%c1, %c0_11, %c0_12] : memref<3x88x320xbf16, #tpu.memory_space<vmem>>, vector<1x88x320xbf16>
    %19 = vector.shape_cast %18 : vector<1x88x320xbf16> to vector<88x320xbf16>
    %cst_13 = arith.constant dense<0.000000e+00> : vector<8x320xf32>
    %20 = tpu.matmul %17, %19, %cst_13 {dimension_numbers = #tpu.dot_dimension_numbers<[1], [0], [0], [1], [0, 0, 1, 1], [], []>} : vector<8x88xbf16>, vector<88x320xbf16>, vector<8x320xf32> -> vector<8x320xf32>
    %21 = arith.addf %16, %20 : vector<8x320xf32>
    %22 = arith.truncf %12 : vector<8x88xf32> to vector<8x88xbf16>
    %c2 = arith.constant 2 : index
    %c0_14 = arith.constant 0 : index
    %c0_15 = arith.constant 0 : index
    %23 = vector.load %arg4[%c2, %c0_14, %c0_15] : memref<3x88x320xbf16, #tpu.memory_space<vmem>>, vector<1x88x320xbf16>
    %24 = vector.shape_cast %23 : vector<1x88x320xbf16> to vector<88x320xbf16>
    %cst_16 = arith.constant dense<0.000000e+00> : vector<8x320xf32>
    %25 = tpu.matmul %22, %24, %cst_16 {dimension_numbers = #tpu.dot_dimension_numbers<[1], [0], [0], [1], [0, 0, 1, 1], [], []>} : vector<8x88xbf16>, vector<88x320xbf16>, vector<8x320xf32> -> vector<8x320xf32>
    %26 = arith.addf %21, %25 : vector<8x320xf32>
    %cst_17 = arith.constant -0.166992188 : f32
    %27 = vector.broadcast %cst_17 : f32 to vector<8x320xf32>
    %28 = arith.addf %26, %27 : vector<8x320xf32>
    %cst_18 = arith.constant 4.000000e-01 : f32
    %29 = vector.broadcast %cst_18 : f32 to vector<8x320xf32>
    %30 = arith.mulf %29, %28 : vector<8x320xf32>
    %31 = arith.maximumf %28, %30 : vector<8x320xf32>
    %c0_19 = arith.constant 0 : index
    %c0_20 = arith.constant 0 : index
    %c0_21 = arith.constant 0 : index
    %32 = vector.load %arg5[%c0_19, %c0_20, %c0_21] : memref<1x8x320xf32, #tpu.memory_space<vmem>>, vector<1x8x320xf32>
    %33 = vector.shape_cast %32 : vector<1x8x320xf32> to vector<8x320xf32>
    %34 = vector.shape_cast %31 : vector<8x320xf32> to vector<1x8x320xf32>
    tpu.vector_store %arg5[%c0_19, %c0_20, %c0_21], %34 {strides = array<i32>} : memref<1x8x320xf32, #tpu.memory_space<vmem>>, vector<1x8x320xf32>,
    return
  }
  func.func @transform_0(%arg0: i32, %arg1: i32) -> (i32, i32, i32) {
    %c0_i32 = arith.constant 0 : i32
    %c0_i32_0 = arith.constant 0 : i32
    return %arg0, %c0_i32, %arg1 : i32, i32, i32
  }
  func.func @transform_1(%arg0: i32, %arg1: i32) -> (i32, i32, i32, i32) {
    %c0_i32 = arith.constant 0 : i32
    %c0_i32_0 = arith.constant 0 : i32
    %c0_i32_1 = arith.constant 0 : i32
    return %arg0, %arg1, %c0_i32, %c0_i32_0 : i32, i32, i32, i32
  }
  func.func @transform_2(%arg0: i32, %arg1: i32) -> (i32, i32, i32) {
    %c0_i32 = arith.constant 0 : i32
    %c0_i32_0 = arith.constant 0 : i32
    %c0_i32_1 = arith.constant 0 : i32
    %c0_i32_2 = arith.constant 0 : i32
    return %c0_i32, %c0_i32_0, %c0_i32_1 : i32, i32, i32
  }
  func.func @transform_3(%arg0: i32, %arg1: i32) -> (i32, i32, i32) {
    %c0_i32 = arith.constant 0 : i32
    %c0_i32_0 = arith.constant 0 : i32
    return %arg0, %c0_i32, %arg1 : i32, i32, i32
  }
}

</mosaic_0001>

<llo_original>
// kernel: tpu_custom_call.1
$region0: #{tpu_custom_call.1}
  #allocation0 [shape = 'u32[]', space=smem, size = 0x4, offset = 0x4, fixed_abs, tag = 'smem constant byte address 0x4 - core index']
  #allocation1 [shape = 'u32[144,128]{1,0:T(1,128)}', space=vmem, size = 0x12000, scoped, tag = 'internal scratch']
  %s0 = inlined_call_operand.vmem [shape: f32[2,8,80], index: 0, kind: input, shape index: {}]
  %s1 = inlined_call_operand.vmem [shape: f32[2,1,8,2], index: 1, kind: input, shape index: {}]
  %s2 = inlined_call_operand.hbm [shape: bf16[3,88,320], index: 2, kind: input, shape index: {}]
  %s3 = inlined_call_operand.hbm [shape: f32[2,8,320], index: 3, kind: output, shape index: {}]
  %s4 = sld [smem:[#allocation0]]
  $region49: #{tpu_custom_call.1} parent=0
    _
  %s6 = ssub.s32 1, %s4
  %s7 = scalar_select 0, %s6, %s4
  $region1: #{tpu_custom_call.1} parent=0
    #allocation2 [shape = 'u8[202752]{0}', space=vmem, size = 0x31800, scoped, tag = 'input window, operand 2, single buffered']
    #allocation3 [shape = 's32[2]{0}', space=sflag, size = 0x8, scoped, tag = 'scoped memory for tpu_custom_call.1']
    #allocation4 [shape = 's32[2]{0}', space=sflag, size = 0x8, scoped, tag = 'scoped memory for tpu_custom_call.1']
    #allocation5 [shape = 'u8[24576]{0}', space=vmem, size = 0x6000, scoped, tag = 'output window, operand 0']
    %8 = vsyncpa [#allocation3], 0
    %9 = vsyncpa [#allocation4], 0
    %s10 = scalar_lea.sflag [#allocation4], 1
    %11 = vsyncpa %s10, 0
    loop: start=0, step=1, limit=4
    $region2: #{tpu_custom_call.1} parent=1 // loop_pre_header
      _
    $region3: #{tpu_custom_call.1} parent=1 // loop_header
      %s13 = sphi 0, %s17
      %p14 = scmp.ge.s32.totalorder %s13, 4
      %s20 = sphi 0, %s32
      %s21 = sphi 0, %s28
      %s22 = sphi 0, %s20
      %s23 = sphi 0, %s21
      %s24 = sphi 0, %s22
      %s25 = sphi 0, %s23
      %s37 = sphi 0, %s39
      %s40 = sphi 0, %s37
      %s41 = sphi 0, %s40
      %s57 = sphi 0, %s41
      %s65 = sphi 0, %s67
      %s68 = sphi 0, %s65
      %s69 = sphi 0, %s68
      %s85 = sphi 0, %s69
      %s89 = sphi 0, %s89
      %s91 = sphi 0, %s89
      %s92 = sphi 0, %s91
      %s106 = sphi 0, %s92
      %s114 = sphi 0, %s116
      %s117 = sphi 0, %s114
      %s118 = sphi 0, %s117
      %s134 = sphi 0, %s118
    $region4: #{tpu_custom_call.1} parent=1 // loop_header_branch
      %16 = sbr.rel (%p14) target = $region8
    $region5: #{tpu_custom_call.1} parent=1 // loop_body
      %s18 = ssub.s32 %s13, 1
      %s19 = ssub.s32 %s13, 2
      %s26 = sadd.s32 1, %s21
      %p27 = scmp.ge.s32.totalorder %s26, 1
      %s28 = scalar_select %p27, 0, %s26
      %s29 = sadd.s32 1, %s20
      %s30 = scalar_select %p27, %s29, %s20
      %p31 = scmp.ge.s32.totalorder %s30, 2
      %s32 = scalar_select %p31, 0, %s30
      %s33 = ssub.s32 %s20, %s32
      %s34 = ssub.s32 %s21, %s28
      %s35 = sor.u32 %s33, %s34
      %p36 = scmp.eq.s32.totalorder %s35, 0
      %s38 = sadd.s32 %s37, 1
      %s39 = scalar_select %p36, %s37, %s38
      %p42 = pneg %p36
      %p43 = scmp.eq.s32.totalorder %s13, 1
      %p44 = por %p42, %p43
      %p45 = scmp.ne.s32.totalorder %s37, %s40
      %p46 = scmp.eq.s32.totalorder %s13, 0
      %p47 = por %p45, %p46
      %p48 = scmp.ne.s32.totalorder %s37, %s40
      %p49 = scmp.eq.s32.totalorder %s18, 1
      %p50 = por %p48, %p49
      %p51 = scmp.ne.s32.totalorder %s40, %s41
      %p52 = scmp.eq.s32.totalorder %s18, 0
      %p53 = por %p51, %p52
      %p54 = scmp.ne.s32.totalorder %s40, %s41
      %p55 = scmp.eq.s32.totalorder %s19, 1
      %p56 = por %p54, %p55
      %p58 = scmp.ne.s32.totalorder %s41, %s57
      %p59 = scmp.eq.s32.totalorder %s19, 0
      %p60 = por %p58, %p59
      %s61 = ssub.s32 %s20, %s32
      %s62 = ssub.s32 %s21, %s28
      %s63 = sor.u32 %s61, %s62
      %p64 = scmp.eq.s32.totalorder %s63, 0
      %s66 = sadd.s32 %s65, 1
      %s67 = scalar_select %p64, %s65, %s66
      %p70 = pneg %p64
      %p71 = scmp.eq.s32.totalorder %s13, 1
      %p72 = por %p70, %p71
      %p73 = scmp.ne.s32.totalorder %s65, %s68
      %p74 = scmp.eq.s32.totalorder %s13, 0
      %p75 = por %p73, %p74
      %p76 = scmp.ne.s32.totalorder %s65, %s68
      %p77 = scmp.eq.s32.totalorder %s18, 1
      %p78 = por %p76, %p77
      %p79 = scmp.ne.s32.totalorder %s68, %s69
      %p80 = scmp.eq.s32.totalorder %s18, 0
      %p81 = por %p79, %p80
      %p82 = scmp.ne.s32.totalorder %s68, %s69
      %p83 = scmp.eq.s32.totalorder %s19, 1
      %p84 = por %p82, %p83
      %p86 = scmp.ne.s32.totalorder %s69, %s85
      %p87 = scmp.eq.s32.totalorder %s19, 0
      %p88 = por %p86, %p87
      %s90 = sadd.s32 %s89, 1
      %p93 = scmp.eq.s32.totalorder %s13, 1
      %p94 = scmp.ne.s32.totalorder %s89, %s91
      %p95 = scmp.eq.s32.totalorder %s13, 0
      %p96 = por %p94, %p95
      %p97 = scmp.ne.s32.totalorder %s89, %s91
      %p98 = scmp.eq.s32.totalorder %s18, 1
      %p99 = por %p97, %p98
      %p100 = scmp.ne.s32.totalorder %s91, %s92
      %p101 = scmp.eq.s32.totalorder %s18, 0
      %p102 = por %p100, %p101
      %p103 = scmp.ne.s32.totalorder %s91, %s92
      %p104 = scmp.eq.s32.totalorder %s19, 1
      %p105 = por %p103, %p104
      %p107 = scmp.ne.s32.totalorder %s92, %s106
      %p108 = scmp.eq.s32.totalorder %s19, 0
      %p109 = por %p107, %p108
      %s110 = ssub.s32 %s20, %s32
      %s111 = ssub.s32 %s21, %s28
      %s112 = sor.u32 %s110, %s111
      %p113 = scmp.eq.s32.totalorder %s112, 0
      %s115 = sadd.s32 %s114, 1
      %s116 = scalar_select %p113, %s114, %s115
      %p119 = pneg %p113
      %p120 = scmp.eq.s32.totalorder %s13, 1
      %p121 = por %p119, %p120
      %p122 = scmp.ne.s32.totalorder %s114, %s117
      %p123 = scmp.eq.s32.totalorder %s13, 0
      %p124 = por %p122, %p123
      %p125 = scmp.ne.s32.totalorder %s114, %s117
      %p126 = scmp.eq.s32.totalorder %s18, 1
      %p127 = por %p125, %p126
      %p128 = scmp.ne.s32.totalorder %s117, %s118
      %p129 = scmp.eq.s32.totalorder %s18, 0
      %p130 = por %p128, %p129
      %p131 = scmp.ne.s32.totalorder %s117, %s118
      %p132 = scmp.eq.s32.totalorder %s19, 1
      %p133 = por %p131, %p132
      %p135 = scmp.ne.s32.totalorder %s118, %s134
      %p136 = scmp.eq.s32.totalorder %s19, 0
      %p137 = por %p135, %p136
      %p138 = scmp.le.s32.totalorder 1, %s13
      %p139 = scmp.lt.s32.totalorder %s13, 3
      %p140 = pnand %p138, %p139
      %p141 = pneg %p140
      // Predicated region
      $region9: #{tpu_custom_call.1} parent=5 // pred_check
        _
      $region10: #{tpu_custom_call.1} parent=5 // pred_check_branch
        %143 = sbr.rel (%p140) target = $region12
      $region11: #{tpu_custom_call.1} parent=5 // pred_region
        %s144 = ssub.s32 %s13, 1
        // Predicated region
        $region13: #{tpu_custom_call.1} parent=11 // pred_check
          %p145 = pneg %p102
        $region14: #{tpu_custom_call.1} parent=11 // pred_check_branch
          %147 = sbr.rel (%p145) target = $region16
        $region15: #{tpu_custom_call.1} parent=11 // pred_region
          %s149 = ssub.s32 6336, 6336
          %150 = vsyncadd [#allocation3], %s149
          %s151 = sshll.u32 [#allocation2], 4
          %s152 = int_to_ptr.vmem [resolvable:$true] %s151
          %157 = dma.hbm_to_vmem [thread:$0]  %s2, 6336, %s152, [#allocation3], 192, 192, 12
        $region16: #{tpu_custom_call.1} parent=11 // pred_fallthru
          _
      $region12: #{tpu_custom_call.1} parent=5 // pred_fallthru
        _
      %p158 = scmp.lt.s32.totalorder %s13, 2
      // Predicated region
      $region17: #{tpu_custom_call.1} parent=5 // pred_check
        %p159 = pneg %p158
      $region18: #{tpu_custom_call.1} parent=5 // pred_check_branch
        %161 = sbr.rel (%p159) target = $region20
      $region19: #{tpu_custom_call.1} parent=5 // pred_region
        // Predicated region
        $region21: #{tpu_custom_call.1} parent=19 // pred_check
          %p162 = pneg %p47
        $region22: #{tpu_custom_call.1} parent=19 // pred_check_branch
          %164 = sbr.rel (%p162) target = $region24
        $region23: #{tpu_custom_call.1} parent=19 // pred_region
          %p165 = scmp.lt.s32.totalorder %s20, 1
          %s166 = scalar_select %p165, %s20, 1
          %p167 = scmp.lt.s32.totalorder %s21, 0
          %s168 = scalar_select %p167, %s21, 0
          %s169 = sadd.s32 %s168, %s166
          %s170 = smul.addr %s169, 8
          %s171 = scalar_lea.vmem %s0, %s170
        $region24: #{tpu_custom_call.1} parent=19 // pred_fallthru
          _
        // Predicated region
        $region25: #{tpu_custom_call.1} parent=19 // pred_check
          %p172 = pneg %p75
        $region26: #{tpu_custom_call.1} parent=19 // pred_check_branch
          %174 = sbr.rel (%p172) target = $region28
        $region27: #{tpu_custom_call.1} parent=19 // pred_region
          %p175 = scmp.lt.s32.totalorder %s20, 1
          %s176 = scalar_select %p175, %s20, 1
          %p177 = scmp.lt.s32.totalorder %s21, 0
          %s178 = scalar_select %p177, %s21, 0
          %s179 = sadd.s32 %s178, %s176
          %s180 = smul.addr %s179, 8
          %s181 = scalar_lea.vmem %s1, %s180
        $region28: #{tpu_custom_call.1} parent=19 // pred_fallthru
          _
      $region20: #{tpu_custom_call.1} parent=5 // pred_fallthru
        _
      %p182 = scmp.le.s32.totalorder 1, %s13
      %p183 = scmp.lt.s32.totalorder %s13, 3
      %p184 = pnand %p182, %p183
      %p185 = pneg %p184
      // Predicated region
      $region29: #{tpu_custom_call.1} parent=5 // pred_check
        _
      $region30: #{tpu_custom_call.1} parent=5 // pred_check_branch
        %187 = sbr.rel (%p184) target = $region32
      $region31: #{tpu_custom_call.1} parent=5 // pred_region
        %s188 = ssub.s32 %s13, 1
        // Predicated region
        $region33: #{tpu_custom_call.1} parent=31 // pred_check
          %p189 = pneg %p102
        $region34: #{tpu_custom_call.1} parent=31 // pred_check_branch
          %191 = sbr.rel (%p189) target = $region36
        $region35: #{tpu_custom_call.1} parent=31 // pred_region
          %192 = dma.done [#allocation3], 6336
        $region36: #{tpu_custom_call.1} parent=31 // pred_fallthru
          _
        %p193 = scmp.lt.s32.totalorder %s22, 1
        %s194 = scalar_select %p193, %s22, 1
        %p195 = scmp.lt.s32.totalorder %s23, 0
        %s196 = scalar_select %p195, %s23, 0
        %s197 = sadd.s32 %s196, %s194
        %s198 = smul.addr %s197, 8
        %s199 = scalar_lea.vmem %s0, %s198
        %p200 = pneg %p53
        %p201 = pneg %p50
        %p202 = scmp.lt.s32.totalorder %s22, 1
        %s203 = scalar_select %p202, %s22, 1
        %p204 = scmp.lt.s32.totalorder %s23, 0
        %s205 = scalar_select %p204, %s23, 0
        %s206 = sadd.s32 %s205, %s203
        %s207 = smul.addr %s206, 8
        %s208 = scalar_lea.vmem %s1, %s207
        %p209 = pneg %p81
        %p210 = pneg %p78
        %p211 = pneg %p102
        %p212 = pneg %p99
        %p213 = pneg %p130
        %p214 = pneg %p127
        %s215 = sand.u32 %s117, 1
        %s216 = scalar_lea.sflag [#allocation4], %s215
        %s217 = sand.u32 %s117, 1
        %s218 = smul.addr %s217, 24
        %s219 = scalar_lea.vmem [#allocation5], %s218
        %p220 = scmp.lt.s32.totalorder %s22, 1
        %s221 = scalar_select %p220, %s22, 1
        %p222 = scmp.lt.s32.totalorder %s23, 0
        %s223 = scalar_select %p222, %s23, 0
        %s224 = sadd.s32 %s223, %s221
        %s225 = smul.addr %s224, 8
        %s226 = scalar_lea.vmem %s0, %s225
        %p227 = scmp.lt.s32.totalorder %s22, 1
        %s228 = scalar_select %p227, %s22, 1
        %p229 = scmp.lt.s32.totalorder %s23, 0
        %s230 = scalar_select %p229, %s23, 0
        %s231 = sadd.s32 %s230, %s228
        %s232 = smul.addr %s231, 8
        %s233 = scalar_lea.vmem %s1, %s232
        %s234 = smul.u32 3, %s23
        %v236 = vld [vmem:[%s226] sm:$0xff]
        %v237 = vld [vmem:[%s233] sm:$0xff]
        %239 = vrot.lane.b32.xlu0 %v236, 1
        %v240 = vpop.permute.xlu0 %239
        %243 = vrot.lane.b32.xlu0 %v237, 80
        %v244 = vpop.permute.xlu0 %243
        %vm246 = vcmask 7168
        %v247 = vsel %vm246, %v237, %v240
        %vm248 = vcmask 662528
        %v249 = vsel %vm248, %v247, %v244
        %vm250 = vcmask 670720
        %v251 = vsel %vm250, %v249, 0.0
        %v253 = vrot.slane %v251, 1
        %vm255 = vcmask 1046528
        %v256 = vsel %vm255, %v253, 0.0
        %v257 = vrot.slane %v251, 7
        %vm259 = vcmask 1040384
        %v260 = vsel %vm259, 0.0, %v257
        %v261 = vpack.c.bf16 %v256, %v256
        %v262 = vld [vmem:[#allocation2] sm:$0xff]
        %v263 = vld [vmem:[#allocation2 + $0x8] sm:$0xf]
        %v264 = vld [vmem:[#allocation2 + $0xc] sm:$0xff]
        %v265 = vld [vmem:[#allocation2 + $0x14] sm:$0xf]
        %v266 = vld [vmem:[#allocation2 + $0x18] sm:$0xff]
        %v267 = vld [vmem:[#allocation2 + $0x20] sm:$0xf]
        %v268 = vld [vmem:[#allocation2 + $0x24] sm:$0xff]
        %v269 = vld [vmem:[#allocation2 + $0x2c] sm:$0xf]
        %v270 = vld [vmem:[#allocation2 + $0x30] sm:$0xff]
        %v271 = vld [vmem:[#allocation2 + $0x38] sm:$0xf]
        %v272 = vld [vmem:[#allocation2 + $0x3c] sm:$0xff]
        %v273 = vld [vmem:[#allocation2 + $0x44] sm:$0xf]
        %v274 = vld [vmem:[#allocation2 + $0x48] sm:$0xff]
        %v275 = vld [vmem:[#allocation2 + $0x50] sm:$0xf]
        %v276 = vld [vmem:[#allocation2 + $0x54] sm:$0xff]
        %v277 = vld [vmem:[#allocation2 + $0x5c] sm:$0xf]
        %v278 = vld [vmem:[#allocation2 + $0x60] sm:$0xff]
        %v279 = vld [vmem:[#allocation2 + $0x68] sm:$0xf]
        %v280 = vld [vmem:[#allocation2 + $0x6c] sm:$0xff]
        %v281 = vld [vmem:[#allocation2 + $0x74] sm:$0xf]
        %v282 = vld [vmem:[#allocation2 + $0x78] sm:$0xff]
        %v283 = vld [vmem:[#allocation2 + $0x80] sm:$0xf]
        %v284 = vpack.c.bf16 %v251, %v251
        %s285 = scalar_lea.vmem [#allocation2], 132
        %v286 = vld [vmem:[%s285] sm:$0xff]
        %v287 = vld [vmem:[%s285 + $0x8] sm:$0xf]
        %v288 = vld [vmem:[%s285 + $0xc] sm:$0xff]
        %v289 = vld [vmem:[%s285 + $0x14] sm:$0xf]
        %v290 = vld [vmem:[%s285 + $0x18] sm:$0xff]
        %v291 = vld [vmem:[%s285 + $0x20] sm:$0xf]
        %v292 = vld [vmem:[%s285 + $0x24] sm:$0xff]
        %v293 = vld [vmem:[%s285 + $0x2c] sm:$0xf]
        %v294 = vld [vmem:[%s285 + $0x30] sm:$0xff]
        %v295 = vld [vmem:[%s285 + $0x38] sm:$0xf]
        %v296 = vld [vmem:[%s285 + $0x3c] sm:$0xff]
        %v297 = vld [vmem:[%s285 + $0x44] sm:$0xf]
        %v298 = vld [vmem:[%s285 + $0x48] sm:$0xff]
        %v299 = vld [vmem:[%s285 + $0x50] sm:$0xf]
        %v300 = vld [vmem:[%s285 + $0x54] sm:$0xff]
        %v301 = vld [vmem:[%s285 + $0x5c] sm:$0xf]
        %v302 = vld [vmem:[%s285 + $0x60] sm:$0xff]
        %v303 = vld [vmem:[%s285 + $0x68] sm:$0xf]
        %v304 = vld [vmem:[%s285 + $0x6c] sm:$0xff]
        %v305 = vld [vmem:[%s285 + $0x74] sm:$0xf]
        %v306 = vld [vmem:[%s285 + $0x78] sm:$0xff]
        %v307 = vld [vmem:[%s285 + $0x80] sm:$0xf]
        %v330 = vunpack.c.l.b16 %v286
        %v331 = vunpack.c.h.b16 %v286
        %v332 = vunpack.c.l.b16 %v287
        %v333 = vunpack.c.l.b16 %v288
        %v334 = vunpack.c.h.b16 %v288
        %v335 = vunpack.c.l.b16 %v289
        %v336 = vunpack.c.l.b16 %v290
        %v337 = vunpack.c.h.b16 %v290
        %v338 = vunpack.c.l.b16 %v291
        %v339 = vunpack.c.l.b16 %v292
        %v340 = vunpack.c.h.b16 %v292
        %v341 = vunpack.c.l.b16 %v293
        %v342 = vunpack.c.l.b16 %v294
        %v343 = vunpack.c.h.b16 %v294
        %v344 = vunpack.c.l.b16 %v295
        %v345 = vunpack.c.l.b16 %v296
        %v346 = vunpack.c.h.b16 %v296
        %v347 = vunpack.c.l.b16 %v297
        %v348 = vunpack.c.l.b16 %v298
        %v349 = vunpack.c.h.b16 %v298
        %v350 = vunpack.c.l.b16 %v299
        %v351 = vunpack.c.l.b16 %v300
        %v352 = vunpack.c.h.b16 %v300
        %v353 = vunpack.c.l.b16 %v301
        %v354 = vunpack.c.l.b16 %v302
        %v355 = vunpack.c.h.b16 %v302
        %v356 = vunpack.c.l.b16 %v303
        %v357 = vunpack.c.l.b16 %v304
        %v358 = vunpack.c.h.b16 %v304
        %v359 = vunpack.c.l.b16 %v305
        %v360 = vunpack.c.l.b16 %v306
        %v361 = vunpack.c.h.b16 %v306
        %v362 = vunpack.c.l.b16 %v307
        %v363 = vpack.c.b16 %v333, %v330
        %v364 = vpack.c.b16 %v334, %v331
        %v365 = vpack.c.b16 %v335, %v332
        %v366 = vpack.c.b16 %v339, %v336
        %v367 = vpack.c.b16 %v340, %v337
        %v368 = vpack.c.b16 %v341, %v338
        %v369 = vpack.c.b16 %v345, %v342
        %v370 = vpack.c.b16 %v346, %v343
        %v371 = vpack.c.b16 %v347, %v344
        %v372 = vpack.c.b16 %v351, %v348
        %v373 = vpack.c.b16 %v352, %v349
        %v374 = vpack.c.b16 %v353, %v350
        %v375 = vpack.c.b16 %v357, %v354
        %v376 = vpack.c.b16 %v358, %v355
        %v377 = vpack.c.b16 %v359, %v356
        %v378 = vpack.c.b16 %v360, %v360
        %v379 = vpack.c.b16 %v361, %v361
        %v380 = vpack.c.b16 %v362, %v362
        %vm396 = vcmask 719872
        %v398 = vsel %vm396, %v284, 0
        %vm400 = vcmask 1043456
        %v402 = vsel %vm400, %v378, 0
        %v405 = vsel %vm400, %v379, 0
        %v408 = vsel %vm400, %v380, 0
        %410 = vmatprep.subr.bf16.mxu0 0
        %411 = vmatpush1.bf16.msra.mxu0 0
        %412 = vmatprep.subr.bf16.mxu0 0
        %413 = vmatpush1.bf16.msra.mxu0 0
        %414 = vmatprep.subr.bf16.mxu0 %v405
        %415 = vmatpush1.bf16.msra.mxu0 %v402
        %416 = vmatprep.subr.bf16.mxu0 %v376
        %417 = vmatpush1.bf16.msra.mxu0 %v375
        %418 = vmatprep.subr.bf16.mxu0 %v373
        %419 = vmatpush1.bf16.msra.mxu0 %v372
        %420 = vmatprep.subr.bf16.mxu0 %v370
        %421 = vmatpush1.bf16.msra.mxu0 %v369
        %422 = vmatprep.subr.bf16.mxu0 %v367
        %423 = vmatpush1.bf16.msra.mxu0 %v366
        %424 = vmatprep.subr.bf16.mxu0 %v364
        %425 = vmatpush1.bf16.msra.mxu0 %v363
        %426 = vmatprep.subr.bf16.mxu0 0
        %427 = vmatpush2.bf16.msra.mxu0 0
        %428 = vmatprep.subr.bf16.mxu0 0
        %429 = vmatpush2.bf16.msra.mxu0 0
        %430 = vmatprep.subr.bf16.mxu0 0
        %431 = vmatpush2.bf16.msra.mxu0 0
        %432 = vmatprep.subr.bf16.mxu0 0
        %433 = vmatpush2.bf16.msra.mxu0 0
        %434 = vmatprep.subr.bf16.mxu0 0
        %435 = vmatpush2.bf16.msra.mxu0 0
        %436 = vmatprep.subr.bf16.mxu0 0
        %437 = vmatpush2.bf16.msra.mxu0 0
        %438 = vmatprep.subr.bf16.mxu0 0
        %439 = vmatpush2.bf16.msra.mxu0 0
        %440 = vmatprep.subr.bf16.mxu0 0
        %441 = vmatpush2.bf16.msra.mxu0 0
        %442 = vmatprep.mubr.bf16.mxu0 0
        %443 = vmatmul.mubr.bf16.gmra.mxu0 %v398
        %v444 = vpop.f32.mrf.mxu0
        %v445 = vadd.f32 0.0, %v444
        %v446 = vpop.f32.mrf.mxu0
        %v447 = vadd.f32 0.0, %v446
        %v448 = vpop.f32.mrf.mxu0
        %v449 = vpop.f32.mrf.mxu0
        %450 = vdwg.mxu0
        %451 = vmatprep.subr.bf16.mxu0 0
        %452 = vmatpush1.bf16.msra.mxu0 0
        %453 = vmatprep.subr.bf16.mxu0 0
        %454 = vmatpush1.bf16.msra.mxu0 0
        %455 = vmatprep.subr.bf16.mxu0 0
        %456 = vmatpush1.bf16.msra.mxu0 %v408
        %457 = vmatprep.subr.bf16.mxu0 0
        %458 = vmatpush1.bf16.msra.mxu0 %v377
        %459 = vmatprep.subr.bf16.mxu0 0
        %460 = vmatpush1.bf16.msra.mxu0 %v374
        %461 = vmatprep.subr.bf16.mxu0 0
        %462 = vmatpush1.bf16.msra.mxu0 %v371
        %463 = vmatprep.subr.bf16.mxu0 0
        %464 = vmatpush1.bf16.msra.mxu0 %v368
        %465 = vmatprep.subr.bf16.mxu0 0
        %466 = vmatpush1.bf16.msra.mxu0 %v365
        %467 = vmatprep.subr.bf16.mxu0 0
        %468 = vmatpush2.bf16.msra.mxu0 0
        %469 = vmatprep.subr.bf16.mxu0 0
        %470 = vmatpush2.bf16.msra.mxu0 0
        %471 = vmatprep.subr.bf16.mxu0 0
        %472 = vmatpush2.bf16.msra.mxu0 0
        %473 = vmatprep.subr.bf16.mxu0 0
        %474 = vmatpush2.bf16.msra.mxu0 0
        %475 = vmatprep.subr.bf16.mxu0 0
        %476 = vmatpush2.bf16.msra.mxu0 0
        %477 = vmatprep.subr.bf16.mxu0 0
        %478 = vmatpush2.bf16.msra.mxu0 0
        %479 = vmatprep.subr.bf16.mxu0 0
        %480 = vmatpush2.bf16.msra.mxu0 0
        %481 = vmatprep.subr.bf16.mxu0 0
        %482 = vmatpush2.bf16.msra.mxu0 0
        %483 = vmatprep.mubr.bf16.mxu0 0
        %484 = vmatmul.mubr.bf16.gmra.mxu0 %v398
        %v485 = vpop.f32.mrf.mxu0
        %v486 = vadd.f32 0.0, %v485
        %v487 = vpop.f32.mrf.mxu0
        %v488 = vpop.f32.mrf.mxu0
        %v489 = vpop.f32.mrf.mxu0
        %490 = vdwg.mxu0
        %v513 = vunpack.c.l.b16 %v262
        %v514 = vunpack.c.h.b16 %v262
        %v515 = vunpack.c.l.b16 %v263
        %v516 = vunpack.c.l.b16 %v264
        %v517 = vunpack.c.h.b16 %v264
        %v518 = vunpack.c.l.b16 %v265
        %v519 = vunpack.c.l.b16 %v266
        %v520 = vunpack.c.h.b16 %v266
        %v521 = vunpack.c.l.b16 %v267
        %v522 = vunpack.c.l.b16 %v268
        %v523 = vunpack.c.h.b16 %v268
        %v524 = vunpack.c.l.b16 %v269
        %v525 = vunpack.c.l.b16 %v270
        %v526 = vunpack.c.h.b16 %v270
        %v527 = vunpack.c.l.b16 %v271
        %v528 = vunpack.c.l.b16 %v272
        %v529 = vunpack.c.h.b16 %v272
        %v530 = vunpack.c.l.b16 %v273
        %v531 = vunpack.c.l.b16 %v274
        %v532 = vunpack.c.h.b16 %v274
        %v533 = vunpack.c.l.b16 %v275
        %v534 = vunpack.c.l.b16 %v276
        %v535 = vunpack.c.h.b16 %v276
        %v536 = vunpack.c.l.b16 %v277
        %v537 = vunpack.c.l.b16 %v278
        %v538 = vunpack.c.h.b16 %v278
        %v539 = vunpack.c.l.b16 %v279
        %v540 = vunpack.c.l.b16 %v280
        %v541 = vunpack.c.h.b16 %v280
        %v542 = vunpack.c.l.b16 %v281
        %v543 = vunpack.c.l.b16 %v282
        %v544 = vunpack.c.h.b16 %v282
        %v545 = vunpack.c.l.b16 %v283
        %v546 = vpack.c.b16 %v516, %v513
        %v547 = vpack.c.b16 %v517, %v514
        %v548 = vpack.c.b16 %v518, %v515
        %v549 = vpack.c.b16 %v522, %v519
        %v550 = vpack.c.b16 %v523, %v520
        %v551 = vpack.c.b16 %v524, %v521
        %v552 = vpack.c.b16 %v528, %v525
        %v553 = vpack.c.b16 %v529, %v526
        %v554 = vpack.c.b16 %v530, %v527
        %v555 = vpack.c.b16 %v534, %v531
        %v556 = vpack.c.b16 %v535, %v532
        %v557 = vpack.c.b16 %v536, %v533
        %v558 = vpack.c.b16 %v540, %v537
        %v559 = vpack.c.b16 %v541, %v538
        %v560 = vpack.c.b16 %v542, %v539
        %v561 = vpack.c.b16 %v543, %v543
        %v562 = vpack.c.b16 %v544, %v544
        %v563 = vpack.c.b16 %v545, %v545
        %v580 = vsel %vm396, %v261, 0
        %v583 = vsel %vm400, %v561, 0
        %v586 = vsel %vm400, %v562, 0
        %v589 = vsel %vm400, %v563, 0
        %591 = vmatprep.subr.bf16.mxu0 0
        %592 = vmatpush1.bf16.msra.mxu0 0
        %593 = vmatprep.subr.bf16.mxu0 0
        %594 = vmatpush1.bf16.msra.mxu0 0
        %595 = vmatprep.subr.bf16.mxu0 %v586
        %596 = vmatpush1.bf16.msra.mxu0 %v583
        %597 = vmatprep.subr.bf16.mxu0 %v559
        %598 = vmatpush1.bf16.msra.mxu0 %v558
        %599 = vmatprep.subr.bf16.mxu0 %v556
        %600 = vmatpush1.bf16.msra.mxu0 %v555
        %601 = vmatprep.subr.bf16.mxu0 %v553
        %602 = vmatpush1.bf16.msra.mxu0 %v552
        %603 = vmatprep.subr.bf16.mxu0 %v550
        %604 = vmatpush1.bf16.msra.mxu0 %v549
        %605 = vmatprep.subr.bf16.mxu0 %v547
        %606 = vmatpush1.bf16.msra.mxu0 %v546
        %607 = vmatprep.subr.bf16.mxu0 0
        %608 = vmatpush2.bf16.msra.mxu0 0
        %609 = vmatprep.subr.bf16.mxu0 0
        %610 = vmatpush2.bf16.msra.mxu0 0
        %611 = vmatprep.subr.bf16.mxu0 0
        %612 = vmatpush2.bf16.msra.mxu0 0
        %613 = vmatprep.subr.bf16.mxu0 0
        %614 = vmatpush2.bf16.msra.mxu0 0
        %615 = vmatprep.subr.bf16.mxu0 0
        %616 = vmatpush2.bf16.msra.mxu0 0
        %617 = vmatprep.subr.bf16.mxu0 0
        %618 = vmatpush2.bf16.msra.mxu0 0
        %619 = vmatprep.subr.bf16.mxu0 0
        %620 = vmatpush2.bf16.msra.mxu0 0
        %621 = vmatprep.subr.bf16.mxu0 0
        %622 = vmatpush2.bf16.msra.mxu0 0
        %623 = vmatprep.mubr.bf16.mxu0 0
        %624 = vmatmul.mubr.bf16.gmra.mxu0 %v580
        %v625 = vpop.f32.mrf.mxu0
        %v626 = vadd.f32 %v445, %v625
        %v627 = vpop.f32.mrf.mxu0
        %v628 = vadd.f32 %v447, %v627
        %v629 = vpop.f32.mrf.mxu0
        %v630 = vpop.f32.mrf.mxu0
        %631 = vdwg.mxu0
        %632 = vmatprep.subr.bf16.mxu0 0
        %633 = vmatpush1.bf16.msra.mxu0 0
        %634 = vmatprep.subr.bf16.mxu0 0
        %635 = vmatpush1.bf16.msra.mxu0 0
        %636 = vmatprep.subr.bf16.mxu0 0
        %637 = vmatpush1.bf16.msra.mxu0 %v589
        %638 = vmatprep.subr.bf16.mxu0 0
        %639 = vmatpush1.bf16.msra.mxu0 %v560
        %640 = vmatprep.subr.bf16.mxu0 0
        %641 = vmatpush1.bf16.msra.mxu0 %v557
        %642 = vmatprep.subr.bf16.mxu0 0
        %643 = vmatpush1.bf16.msra.mxu0 %v554
        %644 = vmatprep.subr.bf16.mxu0 0
        %645 = vmatpush1.bf16.msra.mxu0 %v551
        %646 = vmatprep.subr.bf16.mxu0 0
        %647 = vmatpush1.bf16.msra.mxu0 %v548
        %648 = vmatprep.subr.bf16.mxu0 0
        %649 = vmatpush2.bf16.msra.mxu0 0
        %650 = vmatprep.subr.bf16.mxu0 0
        %651 = vmatpush2.bf16.msra.mxu0 0
        %652 = vmatprep.subr.bf16.mxu0 0
        %653 = vmatpush2.bf16.msra.mxu0 0
        %654 = vmatprep.subr.bf16.mxu0 0
        %655 = vmatpush2.bf16.msra.mxu0 0
        %656 = vmatprep.subr.bf16.mxu0 0
        %657 = vmatpush2.bf16.msra.mxu0 0
        %658 = vmatprep.subr.bf16.mxu0 0
        %659 = vmatpush2.bf16.msra.mxu0 0
        %660 = vmatprep.subr.bf16.mxu0 0
        %661 = vmatpush2.bf16.msra.mxu0 0
        %662 = vmatprep.subr.bf16.mxu0 0
        %663 = vmatpush2.bf16.msra.mxu0 0
        %664 = vmatprep.mubr.bf16.mxu0 0
        %665 = vmatmul.mubr.bf16.gmra.mxu0 %v580
        %v666 = vpop.f32.mrf.mxu0
        %v667 = vadd.f32 %v486, %v666
        %v668 = vpop.f32.mrf.mxu0
        %v669 = vpop.f32.mrf.mxu0
        %v670 = vpop.f32.mrf.mxu0
        %671 = vdwg.mxu0
        %v672 = vpack.c.bf16 %v260, %v260
        %s673 = scalar_lea.vmem [#allocation2], 264
        %v674 = vld [vmem:[%s673] sm:$0xff]
        %v675 = vld [vmem:[%s673 + $0x8] sm:$0xf]
        %v676 = vld [vmem:[%s673 + $0xc] sm:$0xff]
        %v677 = vld [vmem:[%s673 + $0x14] sm:$0xf]
        %v678 = vld [vmem:[%s673 + $0x18] sm:$0xff]
        %v679 = vld [vmem:[%s673 + $0x20] sm:$0xf]
        %v680 = vld [vmem:[%s673 + $0x24] sm:$0xff]
        %v681 = vld [vmem:[%s673 + $0x2c] sm:$0xf]
        %v682 = vld [vmem:[%s673 + $0x30] sm:$0xff]
        %v683 = vld [vmem:[%s673 + $0x38] sm:$0xf]
        %v684 = vld [vmem:[%s673 + $0x3c] sm:$0xff]
        %v685 = vld [vmem:[%s673 + $0x44] sm:$0xf]
        %v686 = vld [vmem:[%s673 + $0x48] sm:$0xff]
        %v687 = vld [vmem:[%s673 + $0x50] sm:$0xf]
        %v688 = vld [vmem:[%s673 + $0x54] sm:$0xff]
        %v689 = vld [vmem:[%s673 + $0x5c] sm:$0xf]
        %v690 = vld [vmem:[%s673 + $0x60] sm:$0xff]
        %v691 = vld [vmem:[%s673 + $0x68] sm:$0xf]
        %v692 = vld [vmem:[%s673 + $0x6c] sm:$0xff]
        %v693 = vld [vmem:[%s673 + $0x74] sm:$0xf]
        %v694 = vld [vmem:[%s673 + $0x78] sm:$0xff]
        %v695 = vld [vmem:[%s673 + $0x80] sm:$0xf]
        %v718 = vunpack.c.l.b16 %v674
        %v719 = vunpack.c.h.b16 %v674
        %v720 = vunpack.c.l.b16 %v675
        %v721 = vunpack.c.l.b16 %v676
        %v722 = vunpack.c.h.b16 %v676
        %v723 = vunpack.c.l.b16 %v677
        %v724 = vunpack.c.l.b16 %v678
        %v725 = vunpack.c.h.b16 %v678
        %v726 = vunpack.c.l.b16 %v679
        %v727 = vunpack.c.l.b16 %v680
        %v728 = vunpack.c.h.b16 %v680
        %v729 = vunpack.c.l.b16 %v681
        %v730 = vunpack.c.l.b16 %v682
        %v731 = vunpack.c.h.b16 %v682
        %v732 = vunpack.c.l.b16 %v683
        %v733 = vunpack.c.l.b16 %v684
        %v734 = vunpack.c.h.b16 %v684
        %v735 = vunpack.c.l.b16 %v685
        %v736 = vunpack.c.l.b16 %v686
        %v737 = vunpack.c.h.b16 %v686
        %v738 = vunpack.c.l.b16 %v687
        %v739 = vunpack.c.l.b16 %v688
        %v740 = vunpack.c.h.b16 %v688
        %v741 = vunpack.c.l.b16 %v689
        %v742 = vunpack.c.l.b16 %v690
        %v743 = vunpack.c.h.b16 %v690
        %v744 = vunpack.c.l.b16 %v691
        %v745 = vunpack.c.l.b16 %v692
        %v746 = vunpack.c.h.b16 %v692
        %v747 = vunpack.c.l.b16 %v693
        %v748 = vunpack.c.l.b16 %v694
        %v749 = vunpack.c.h.b16 %v694
        %v750 = vunpack.c.l.b16 %v695
        %v751 = vpack.c.b16 %v721, %v718
        %v752 = vpack.c.b16 %v722, %v719
        %v753 = vpack.c.b16 %v723, %v720
        %v754 = vpack.c.b16 %v727, %v724
        %v755 = vpack.c.b16 %v728, %v725
        %v756 = vpack.c.b16 %v729, %v726
        %v757 = vpack.c.b16 %v733, %v730
        %v758 = vpack.c.b16 %v734, %v731
        %v759 = vpack.c.b16 %v735, %v732
        %v760 = vpack.c.b16 %v739, %v736
        %v761 = vpack.c.b16 %v740, %v737
        %v762 = vpack.c.b16 %v741, %v738
        %v763 = vpack.c.b16 %v745, %v742
        %v764 = vpack.c.b16 %v746, %v743
        %v765 = vpack.c.b16 %v747, %v744
        %v766 = vpack.c.b16 %v748, %v748
        %v767 = vpack.c.b16 %v749, %v749
        %v768 = vpack.c.b16 %v750, %v750
        %v785 = vsel %vm396, %v672, 0
        %v788 = vsel %vm400, %v766, 0
        %v791 = vsel %vm400, %v767, 0
        %v794 = vsel %vm400, %v768, 0
        %796 = vmatprep.subr.bf16.mxu0 0
        %797 = vmatpush1.bf16.msra.mxu0 0
        %798 = vmatprep.subr.bf16.mxu0 0
        %799 = vmatpush1.bf16.msra.mxu0 0
        %800 = vmatprep.subr.bf16.mxu0 %v791
        %801 = vmatpush1.bf16.msra.mxu0 %v788
        %802 = vmatprep.subr.bf16.mxu0 %v764
        %803 = vmatpush1.bf16.msra.mxu0 %v763
        %804 = vmatprep.subr.bf16.mxu0 %v761
        %805 = vmatpush1.bf16.msra.mxu0 %v760
        %806 = vmatprep.subr.bf16.mxu0 %v758
        %807 = vmatpush1.bf16.msra.mxu0 %v757
        %808 = vmatprep.subr.bf16.mxu0 %v755
        %809 = vmatpush1.bf16.msra.mxu0 %v754
        %810 = vmatprep.subr.bf16.mxu0 %v752
        %811 = vmatpush1.bf16.msra.mxu0 %v751
        %812 = vmatprep.subr.bf16.mxu0 0
        %813 = vmatpush2.bf16.msra.mxu0 0
        %814 = vmatprep.subr.bf16.mxu0 0
        %815 = vmatpush2.bf16.msra.mxu0 0
        %816 = vmatprep.subr.bf16.mxu0 0
        %817 = vmatpush2.bf16.msra.mxu0 0
        %818 = vmatprep.subr.bf16.mxu0 0
        %819 = vmatpush2.bf16.msra.mxu0 0
        %820 = vmatprep.subr.bf16.mxu0 0
        %821 = vmatpush2.bf16.msra.mxu0 0
        %822 = vmatprep.subr.bf16.mxu0 0
        %823 = vmatpush2.bf16.msra.mxu0 0
        %824 = vmatprep.subr.bf16.mxu0 0
        %825 = vmatpush2.bf16.msra.mxu0 0
        %826 = vmatprep.subr.bf16.mxu0 0
        %827 = vmatpush2.bf16.msra.mxu0 0
        %828 = vmatprep.mubr.bf16.mxu0 0
        %829 = vmatmul.mubr.bf16.gmra.mxu0 %v785
        %v830 = vpop.f32.mrf.mxu0
        %v831 = vadd.f32 0.0, %v830
        %v832 = vpop.f32.mrf.mxu0
        %v833 = vadd.f32 0.0, %v832
        %v834 = vpop.f32.mrf.mxu0
        %v835 = vpop.f32.mrf.mxu0
        %836 = vdwg.mxu0
        %837 = vmatprep.subr.bf16.mxu0 0
        %838 = vmatpush1.bf16.msra.mxu0 0
        %839 = vmatprep.subr.bf16.mxu0 0
        %840 = vmatpush1.bf16.msra.mxu0 0
        %841 = vmatprep.subr.bf16.mxu0 0
        %842 = vmatpush1.bf16.msra.mxu0 %v794
        %843 = vmatprep.subr.bf16.mxu0 0
        %844 = vmatpush1.bf16.msra.mxu0 %v765
        %845 = vmatprep.subr.bf16.mxu0 0
        %846 = vmatpush1.bf16.msra.mxu0 %v762
        %847 = vmatprep.subr.bf16.mxu0 0
        %848 = vmatpush1.bf16.msra.mxu0 %v759
        %849 = vmatprep.subr.bf16.mxu0 0
        %850 = vmatpush1.bf16.msra.mxu0 %v756
        %851 = vmatprep.subr.bf16.mxu0 0
        %852 = vmatpush1.bf16.msra.mxu0 %v753
        %853 = vmatprep.subr.bf16.mxu0 0
        %854 = vmatpush2.bf16.msra.mxu0 0
        %855 = vmatprep.subr.bf16.mxu0 0
        %856 = vmatpush2.bf16.msra.mxu0 0
        %857 = vmatprep.subr.bf16.mxu0 0
        %858 = vmatpush2.bf16.msra.mxu0 0
        %859 = vmatprep.subr.bf16.mxu0 0
        %860 = vmatpush2.bf16.msra.mxu0 0
        %861 = vmatprep.subr.bf16.mxu0 0
        %862 = vmatpush2.bf16.msra.mxu0 0
        %863 = vmatprep.subr.bf16.mxu0 0
        %864 = vmatpush2.bf16.msra.mxu0 0
        %865 = vmatprep.subr.bf16.mxu0 0
        %866 = vmatpush2.bf16.msra.mxu0 0
        %867 = vmatprep.subr.bf16.mxu0 0
        %868 = vmatpush2.bf16.msra.mxu0 0
        %869 = vmatprep.mubr.bf16.mxu0 0
        %870 = vmatmul.mubr.bf16.gmra.mxu0 %v785
        %v871 = vpop.f32.mrf.mxu0
        %v872 = vadd.f32 0.0, %v871
        %v873 = vpop.f32.mrf.mxu0
        %v874 = vpop.f32.mrf.mxu0
        %v875 = vpop.f32.mrf.mxu0
        %876 = vdwg.mxu0
        %v877 = vadd.f32 %v626, %v831
        %v878 = vadd.f32 %v628, %v833
        %v879 = vadd.f32 %v667, %v872
        %v880 = vadd.f32 %v877, -0.16699219
        %v881 = vadd.f32 %v878, -0.16699219
        %v882 = vadd.f32 %v879, -0.16699219
        %v883 = vmul.f32 %v880, 0.4
        %v884 = vmul.f32 %v881, 0.4
        %v885 = vmul.f32 %v882, 0.4
        %v886 = vmax.f32 %v880, %v883
        %v887 = vmax.f32 %v881, %v884
        %v888 = vmax.f32 %v882, %v885
        %889 = vst [vmem:[%s219] sm:$0xff] %v886
        %890 = vst [vmem:[%s219 + $0x8] sm:$0xff] %v887
        %vm891 = vcmask 523264
        %892 = vst.msk [vmem:[%s219 + $0x10] sm:$0xff] %vm891, %v888
        %s893 = sand.u32 %s117, 1
        %s894 = scalar_lea.sflag [#allocation4], %s893
        %s895 = sand.u32 %s117, 1
        %s896 = smul.addr %s895, 24
        %s897 = scalar_lea.vmem [#allocation5], %s896
        // Predicated region
        $region37: #{tpu_custom_call.1} parent=31 // pred_check
          %p898 = pneg %p127
        $region38: #{tpu_custom_call.1} parent=31 // pred_check_branch
          %900 = sbr.rel (%p898) target = $region40
        $region39: #{tpu_custom_call.1} parent=31 // pred_region
          %s901 = smul.u32 3, %s23
          %s903 = ssub.s32 384, 384
          %904 = vsyncadd %s894, %s903
          %s905 = smul.addr %s22, 3
          %s906 = sadd.s32 %s901, %s905
          %s907 = smul.addr %s906, 128
          %s908 = scalar_lea.hbm %s3, %s907
          %s910 = sshll.u32 %s897, 4
          %s911 = int_to_ptr.vmem [resolvable:$true] %s910
          %913 = dma.vmem_to_hbm [thread:$0]  %s911, 384, %s908, %s894
        $region40: #{tpu_custom_call.1} parent=31 // pred_fallthru
          _
      $region32: #{tpu_custom_call.1} parent=5 // pred_fallthru
        _
      %p914 = scmp.le.s32.totalorder 2, %s13
      // Predicated region
      $region41: #{tpu_custom_call.1} parent=5 // pred_check
        %p915 = pneg %p914
      $region42: #{tpu_custom_call.1} parent=5 // pred_check_branch
        %917 = sbr.rel (%p915) target = $region44
      $region43: #{tpu_custom_call.1} parent=5 // pred_region
        %s918 = ssub.s32 %s13, 2
        // Predicated region
        $region45: #{tpu_custom_call.1} parent=43 // pred_check
          %p919 = pneg %p133
        $region46: #{tpu_custom_call.1} parent=43 // pred_check_branch
          %921 = sbr.rel (%p919) target = $region48
        $region47: #{tpu_custom_call.1} parent=43 // pred_region
          %s922 = sand.u32 %s118, 1
          %s923 = scalar_lea.sflag [#allocation4], %s922
          %s924 = sand.u32 %s118, 1
          %s925 = smul.addr %s924, 24
          %s926 = scalar_lea.vmem [#allocation5], %s925
          %927 = dma.done %s923, 384
        $region48: #{tpu_custom_call.1} parent=43 // pred_fallthru
          _
      $region44: #{tpu_custom_call.1} parent=5 // pred_fallthru
        _
    $region6: #{tpu_custom_call.1} parent=1 // loop_footer
      %s17 = sadd.s32 1, %s13
    $region7: #{tpu_custom_call.1} parent=1 // loop_footer_branch
      %12 = sbr.rel target = $region3
    $region8: #{tpu_custom_call.1} parent=1 // loop_exit
      _
    %928 = vsyncpa [#allocation3], 1
    %s929 = scalar_lea.sflag [#allocation3], 1
    %930 = vsyncpa %s929, 1
    %931 = vsyncpa [#allocation4], 1
    %s932 = scalar_lea.sflag [#allocation4], 1
    %933 = vsyncpa %s932, 1

</llo_original>
